<compile_context>
chip_gen: v7x
topology: tpu7x:2x2x1
jax: 0.10.0
libtpu: 0.0.40
codegen_flags: <defaults>
</compile_context>

<pallas_src>
import functools

import jax
import jax.numpy as jnp
from jax.experimental import pallas as pl
from jax.experimental.pallas import tpu as pltpu


_SQRT1_2 = 0.7071067811865476  # 1/sqrt(2)


def _erf_approx(z):
    """erf via Abramowitz & Stegun 7.1.26 (|error| <= 1.5e-7). Kernel-only.

    The divide runs as an EUP approximate reciprocal refined by one Newton step
    (keeps the VALU free; residual error ~1e-7, far inside the test tolerance).
    """
    a1, a2, a3, a4, a5 = (0.254829592, -0.284496736, 1.421413741,
                          -1.453152027, 1.061405429)
    p = 0.3275911
    s = jnp.where(z >= 0.0, 1.0, -1.0)
    az = jnp.abs(z)
    d = 1.0 + p * az
    t = pl.reciprocal(d, approx=True)
    t = t * (2.0 - d * t)              # one Newton-Raphson refinement
    poly = ((((a5 * t + a4) * t + a3) * t + a2) * t + a1) * t
    return s * (1.0 - poly * jnp.exp(-az * az))


def _gelu_exact(x):
    # transformers.activations.gelu:  0.5 * x * (1 + erf(x / sqrt(2)))
    return 0.5 * x * (1.0 + _erf_approx(x * _SQRT1_2))


def _lm_head_kernel(x_ref, wd_ref, consts_ref, wdec_ref, *rest,
                    eps, mxu_dtype, has_dec_bias):
    # x_ref:      (TM, H)   feature row tile (native activation dtype)
    # wd_ref:     (H,  H)   dense weight (in, out), mxu_dtype, resident
    # consts_ref: (8,  H)   f32; row 0 = dense bias, 1 = LN gamma, 2 = LN beta
    # wdec_ref:   (H, TN)   decoder weight tile, mxu_dtype
    # bdec_ref:   (1, TN)   optional decoder bias tile (f32)
    # logits_ref: (TM, TN)  logits output tile
    # emb_ref:    (TM, H)   output_embedding tile (resident across the vocab axis)
    # emb_mxu:    (TM, H)   VMEM scratch: mxu_dtype copy of the embedding (decoder LHS)
    if has_dec_bias:
        bdec_ref, logits_ref, emb_ref, emb_mxu = rest
    else:
        bdec_ref = None
        logits_ref, emb_ref, emb_mxu = rest

    j = pl.program_id(1)

    @pl.when(j == 0)
    def _compute_embedding():
        # dense: bf16 (mxu_dtype) MXU inputs, f32 accumulation.
        h = jnp.dot(x_ref[...].astype(mxu_dtype), wd_ref[...],
                    preferred_element_type=jnp.float32)
        h = h + consts_ref[0:1, :]

        # exact (erf-based) GELU, f32 math.
        h = _gelu_exact(h)

        # LayerNorm over hidden dim (biased variance, PyTorch semantics).
        mean = jnp.mean(h, axis=-1, keepdims=True)
        hc = h - mean
        var = jnp.mean(hc * hc, axis=-1, keepdims=True)
        inv = jax.lax.rsqrt(var + eps)
        emb = hc * inv * consts_ref[1:2, :] + consts_ref[2:3, :]

        emb_ref[...] = emb.astype(emb_ref.dtype)   # output_embedding (written once per row tile)
        emb_mxu[...] = emb.astype(mxu_dtype)       # bf16 decoder LHS cached across vocab tiles

    # decoder: (TM, H) x (H, TN), mxu_dtype inputs, f32 accumulation.
    acc = jnp.dot(emb_mxu[...], wdec_ref[...], preferred_element_type=jnp.float32)
    if has_dec_bias:
        acc = acc + bdec_ref[...]
    logits_ref[...] = acc.astype(logits_ref.dtype)


def _round_up(x, m):
    return ((x + m - 1) // m) * m


def roberta_lm_head(features, params, *, eps=1e-12, tile_rows=512,
                    tile_vocab=1024, mxu_dtype=jnp.bfloat16, logits_dtype=None):
    """features: [B, S, H].  Returns (logits [B, S, V], output_embedding [B, S, H]).

    params: dense_w (H,H) = PyTorch dense.weight.T, dense_b (H,), ln_gamma (H,),
            ln_beta (H,), decoder_w (H,V) = PyTorch decoder.weight.T, and
            optionally decoder_b (V,) when add_decoder_output_embedding_bias=True.
    """
    B, S, H = features.shape
    M = B * S
    x2 = features.reshape(M, H)
    act_dt = features.dtype
    logits_dt = act_dt if logits_dtype is None else jnp.dtype(logits_dtype)

    # Weights stored/streamed in the MXU dtype (bf16 by default): halves the
    # dominant HBM traffic (decoder weight) and runs the MXU at native rate,
    # while accumulation stays f32.
    dense_w = params["dense_w"].astype(mxu_dtype)            # (H, H)
    dec_w = params["decoder_w"].astype(mxu_dtype)            # (H, V)
    V = params["decoder_w"].shape[1]
    has_dec_bias = params.get("decoder_b", None) is not None

    # dense bias / LN gamma / LN beta packed into one (8, H) f32 block:
    # a single DMA + buffer instead of three separately padded (1,H) blocks.
    consts = jnp.stack([params["dense_b"], params["ln_gamma"],
                        params["ln_beta"]]).astype(jnp.float32)
    consts = jnp.pad(consts, ((0, 5), (0, 0)))               # (8, H)

    # Row tile: dtype-native sublane multiple (f32: 8, bf16: 16, int8/fp8: 32).
    row_align = {4: 8, 2: 16, 1: 32}.get(jnp.dtype(act_dt).itemsize, 8)
    tm = max(row_align,
             min(_round_up(tile_rows, row_align), _round_up(M, row_align)))

    # Vocab tile: lane-dense multiple of 128 that divides the 128-aligned vocab
    # exactly (no second round-up, no dead MXU columns).
    Vp = _round_up(V, 128)
    tn = max(128, (min(tile_vocab, Vp) // 128) * 128)
    while Vp % tn != 0:
        tn -= 128

    # Size the tile plan against the per-core VMEM (v7x: 64 MiB physical).
    try:
        vmem_cap = int(pltpu.get_tpu_info().vmem_capacity_bytes)
    except Exception:
        vmem_cap = 64 * 1024 * 1024   # conservative (v7x per-TensorCore)

    a_sz = jnp.dtype(act_dt).itemsize
    w_sz = jnp.dtype(mxu_dtype).itemsize
    l_sz = jnp.dtype(logits_dt).itemsize

    def vmem_bytes(tm_, tn_):
        est = (2 * H * H * w_sz          # dense W (<= 2 buffers)
               + 2 * 8 * H * 4           # packed bias/gamma/beta
               + 2 * H * tn_ * w_sz      # decoder W tile (double-buffered)
               + 2 * tm_ * H * a_sz      # feature tile
               + 2 * tm_ * H * a_sz      # output_embedding tile
               + 2 * tm_ * tn_ * l_sz    # logits tile
               + tm_ * H * w_sz)         # embedding MXU scratch
        if has_dec_bias:
            est += 2 * 8 * tn_ * 4
        return est

    budget = int(vmem_cap * 0.8)
    while vmem_bytes(tm, tn) > budget and tm > row_align:
        tm = max(row_align, _round_up(tm // 2, row_align))
    while vmem_bytes(tm, tn) > budget and tn > 128:
        tn -= 128
        while Vp % tn != 0:
            tn -= 128

    Mp = _round_up(M, tm)
    if Mp != M:
        x2 = jnp.pad(x2, ((0, Mp - M), (0, 0)))
    # NOTE: for large vocabularies, pre-pad decoder_w to a multiple of 128 once
    # outside the hot path to avoid this per-call HBM copy.
    if Vp != V:
        dec_w = jnp.pad(dec_w, ((0, 0), (0, Vp - V)))

    dec_b2 = None
    if has_dec_bias:
        dec_b2 = params["decoder_b"].astype(jnp.float32).reshape(1, V)
        if Vp != V:
            dec_b2 = jnp.pad(dec_b2, ((0, 0), (0, Vp - V)))

    grid = (Mp // tm, Vp // tn)
    est = vmem_bytes(tm, tn)
    vmem_limit = max(32 * 1024 * 1024, int(est * 1.4))
    vmem_limit = min(vmem_limit, int(vmem_cap * 0.9))   # never above physical VMEM

    kernel = functools.partial(_lm_head_kernel, eps=float(eps),
                               mxu_dtype=jnp.dtype(mxu_dtype),
                               has_dec_bias=has_dec_bias)

    out_shape = (
        jax.ShapeDtypeStruct((Mp, Vp), logits_dt),   # logits
        jax.ShapeDtypeStruct((Mp, H), act_dt),       # output_embedding
    )
    out_specs = (
        pl.BlockSpec((tm, tn), lambda i, j: (i, j)),  # logits (lane-dense stores)
        pl.BlockSpec((tm, H), lambda i, j: (i, 0)),   # output_embedding (resident across j)
    )

    def build(single_buffer_consts):
        const_kw = {}
        if single_buffer_consts:
            # Constant-index blocks never re-DMA; single-buffering them saves
            # VMEM (notably 1x H*H dense-W buffer) for larger tm/tn.
            const_kw = dict(pipeline_mode=pl.Buffered(1))
        in_specs = [
            pl.BlockSpec((tm, H), lambda i, j: (i, 0)),              # feature rows
            pl.BlockSpec((H, H), lambda i, j: (0, 0), **const_kw),   # dense W (resident)
            pl.BlockSpec((8, H), lambda i, j: (0, 0), **const_kw),   # bias/gamma/beta
            pl.BlockSpec((H, tn), lambda i, j: (0, j)),              # decoder W tile
        ]
        if has_dec_bias:
            in_specs.append(pl.BlockSpec((1, tn), lambda i, j: (0, j)))
        return pl.pallas_call(
            kernel,
            out_shape=out_shape,
            grid_spec=pltpu.PrefetchScalarGridSpec(
                num_scalar_prefetch=0,
                grid=grid,
                in_specs=in_specs,
                out_specs=out_specs,
                scratch_shapes=[pltpu.VMEM((tm, H), jnp.dtype(mxu_dtype))],
            ),
            compiler_params=pltpu.CompilerParams(
                dimension_semantics=("parallel", "arbitrary"),
                vmem_limit_bytes=vmem_limit,
            ),
        )

    args = (x2, dense_w, consts, dec_w) + ((dec_b2,) if has_dec_bias else ())

    # TODO(synk): when Mp // tm == 1 on v7x, a leading size-2 vocab-split
    # "parallel" grid axis would keep both TensorCores busy.
    try:
        logits_p, emb_p = build(True)(*args)
    except Exception:
        # pipeline_mode / pl.Buffered(1) not supported by this jax/Mosaic build:
        # fall back to default double-buffering (identical results).
        logits_p, emb_p = build(False)(*args)

    logits = logits_p[:M, :V].reshape(B, S, V)
    emb = emb_p[:M, :].reshape(B, S, H)
    return logits, emb


def _reference(features, params, eps, mxu_dtype=jnp.bfloat16):
    """Pure-JAX reference with the same MXU-input rounding as the kernel."""
    f32 = jnp.float32
    x = features.astype(mxu_dtype).astype(f32)
    wd = params["dense_w"].astype(mxu_dtype).astype(f32)
    h = jnp.einsum("bsh,hk->bsk", x, wd) + params["dense_b"]
    h = 0.5 * h * (1.0 + jax.scipy.special.erf(h * _SQRT1_2))
    mean = jnp.mean(h, axis=-1, keepdims=True)
    var = jnp.mean((h - mean) ** 2, axis=-1, keepdims=True)
    emb = (h - mean) / jnp.sqrt(var + eps) * params["ln_gamma"] + params["ln_beta"]
    wv = params["decoder_w"].astype(mxu_dtype).astype(f32)
    logits = jnp.einsum("bsh,hv->bsv", emb.astype(mxu_dtype).astype(f32), wv)
    if params.get("decoder_b", None) is not None:
        logits = logits + params["decoder_b"]
    return logits, emb


if __name__ == "__main__":
    # Small shapes consistent with the module: batch=2, seq=8, hidden=32, vocab=128.
    B, S, H, V = 2, 8, 32, 128
    eps = 1e-12  # RoBERTa layer_norm_eps

    key = jax.random.PRNGKey(0)
    k1, k2, k3, k4, k5, k6 = jax.random.split(key, 6)

    features = jax.random.normal(k1, (B, S, H), dtype=jnp.float32)

    params = {
        # deterministic synthetic init; dense/decoder weights stored (in, out)
        "dense_w": jax.random.normal(k2, (H, H), jnp.float32) / jnp.sqrt(H),
        "dense_b": 0.01 * jax.random.normal(k3, (H,), jnp.float32),
        "ln_gamma": 1.0 + 0.1 * jax.random.normal(k4, (H,), jnp.float32),
        "ln_beta": 0.01 * jax.random.normal(k5, (H,), jnp.float32),
        "decoder_w": jax.random.normal(k6, (H, V), jnp.float32) / jnp.sqrt(H),
    }

    logits, emb = roberta_lm_head(features, params, eps=eps)
    logits = jax.block_until_ready(logits)
    emb = jax.block_until_ready(emb)

    ref_logits, ref_emb = _reference(features, params, eps, mxu_dtype=jnp.bfloat16)

    assert logits.shape == (B, S, V)
    assert emb.shape == (B, S, H)
    # Epilogue (dense + GELU + LayerNorm) checked tightly against the reference.
    assert jnp.allclose(emb, ref_emb, atol=2e-4, rtol=2e-4), "embedding mismatch"
    # Decoder matmul checked tightly against the (verified) embedding with the
    # same bf16 LHS/RHS rounding the kernel uses.
    dec_ref = jnp.einsum(
        "bsh,hv->bsv",
        emb.astype(jnp.bfloat16).astype(jnp.float32),
        params["decoder_w"].astype(jnp.bfloat16).astype(jnp.float32))
    assert jnp.allclose(logits, dec_ref, atol=2e-4, rtol=2e-4), "logits mismatch"

    print("KERNEL_OK")
</pallas_src>

<mosaic_0001>
module attributes {stable_mosaic.version = 11 : i64} {
  func.func @_lm_head_kernel(%arg0: i32, %arg1: i32, %arg2: memref<16x32xf32, #tpu.memory_space<vmem>>, %arg3: memref<32x32xbf16, #tpu.memory_space<vmem>>, %arg4: memref<8x32xf32, #tpu.memory_space<vmem>>, %arg5: memref<32x128xbf16, #tpu.memory_space<vmem>>, %arg6: memref<16x128xf32, #tpu.memory_space<vmem>>, %arg7: memref<16x32xf32, #tpu.memory_space<vmem>>, %arg8: memref<16x32xbf16, #tpu.memory_space<vmem>>) attributes {dimension_semantics = [#tpu.dimension_semantics<parallel>, #tpu.dimension_semantics<arbitrary>], iteration_bounds = array<i64: 1, 1>, scalar_prefetch = 0 : i64, scratch_operands = 1 : i64, tpu.core_type = #tpu.core_type<tc>, window_params = [{transform_indices = @transform_0, window_bounds = array<i64: 16, 32>}, {pipeline_mode = #tpu.pipeline_mode<synchronous>, transform_indices = @transform_1, window_bounds = array<i64: 32, 32>}, {pipeline_mode = #tpu.pipeline_mode<synchronous>, transform_indices = @transform_2, window_bounds = array<i64: 8, 32>}, {transform_indices = @transform_3, window_bounds = array<i64: 32, 128>}, {transform_indices = @transform_4, window_bounds = array<i64: 16, 128>}, {transform_indices = @transform_5, window_bounds = array<i64: 16, 32>}]} {
    %c0_i32 = arith.constant 0 : i32
    %0 = arith.cmpi eq, %arg1, %c0_i32 : i32
    %1 = arith.extui %0 : i1 to i32
    %c0_i32_0 = arith.constant 0 : i32
    %2 = arith.cmpi ne, %1, %c0_i32_0 : i32
    scf.if %2 {
      %c0_6 = arith.constant 0 : index
      %c0_7 = arith.constant 0 : index
      %7 = vector.load %arg2[%c0_6, %c0_7] : memref<16x32xf32, #tpu.memory_space<vmem>>, vector<16x32xf32>
      %8 = arith.truncf %7 : vector<16x32xf32> to vector<16x32xbf16>
      %c0_8 = arith.constant 0 : index
      %c0_9 = arith.constant 0 : index
      %9 = vector.load %arg3[%c0_8, %c0_9] : memref<32x32xbf16, #tpu.memory_space<vmem>>, vector<32x32xbf16>
      %cst_10 = arith.constant dense<0.000000e+00> : vector<16x32xf32>
      %10 = tpu.matmul %8, %9, %cst_10 {dimension_numbers = #tpu.dot_dimension_numbers<[1], [0], [0], [1], [0, 0, 1, 1], [], []>} : vector<16x32xbf16>, vector<32x32xbf16>, vector<16x32xf32> -> vector<16x32xf32>
      %c0_11 = arith.constant 0 : index
      %c0_12 = arith.constant 0 : index
      %11 = vector.load %arg4[%c0_11, %c0_12] : memref<8x32xf32, #tpu.memory_space<vmem>>, vector<1x32xf32>
      %12 = vector.broadcast %11 : vector<1x32xf32> to vector<16x32xf32>
      %13 = arith.addf %10, %12 : vector<16x32xf32>
      %cst_13 = arith.constant 5.000000e-01 : f32
      %14 = vector.broadcast %cst_13 : f32 to vector<16x32xf32>
      %15 = arith.mulf %14, %13 : vector<16x32xf32>
      %cst_14 = arith.constant 0.707106769 : f32
      %16 = vector.broadcast %cst_14 : f32 to vector<16x32xf32>
      %17 = arith.mulf %13, %16 : vector<16x32xf32>
      %cst_15 = arith.constant 0.000000e+00 : f32
      %18 = vector.broadcast %cst_15 : f32 to vector<16x32xf32>
      %19 = arith.cmpf oge, %17, %18 : vector<16x32xf32>
      %cst_16 = arith.constant 1.000000e+00 : f32
      %cst_17 = arith.constant -1.000000e+00 : f32
      %20 = vector.broadcast %cst_16 : f32 to vector<16x32xf32>
      %21 = vector.broadcast %cst_17 : f32 to vector<16x32xf32>
      %22 = arith.select %19, %20, %21 : vector<16x32xi1>, vector<16x32xf32>
      %23 = math.absf %17 : vector<16x32xf32>
      %cst_18 = arith.constant 0.327591091 : f32
      %24 = vector.broadcast %cst_18 : f32 to vector<16x32xf32>
      %25 = arith.mulf %24, %23 : vector<16x32xf32>
      %cst_19 = arith.constant 1.000000e+00 : f32
      %26 = vector.broadcast %cst_19 : f32 to vector<16x32xf32>
      %27 = arith.addf %26, %25 : vector<16x32xf32>
      %28 = tpu.reciprocal %27 {approx = true} : vector<16x32xf32> -> vector<16x32xf32>
      %29 = arith.mulf %27, %28 : vector<16x32xf32>
      %cst_20 = arith.constant 2.000000e+00 : f32
      %30 = vector.broadcast %cst_20 : f32 to vector<16x32xf32>
      %31 = arith.subf %30, %29 : vector<16x32xf32>
      %32 = arith.mulf %28, %31 : vector<16x32xf32>
      %cst_21 = arith.constant 1.06140542 : f32
      %33 = vector.broadcast %cst_21 : f32 to vector<16x32xf32>
      %34 = arith.mulf %33, %32 : vector<16x32xf32>
      %cst_22 = arith.constant -1.45315206 : f32
      %35 = vector.broadcast %cst_22 : f32 to vector<16x32xf32>
      %36 = arith.addf %34, %35 : vector<16x32xf32>
      %37 = arith.mulf %36, %32 : vector<16x32xf32>
      %cst_23 = arith.constant 1.42141378 : f32
      %38 = vector.broadcast %cst_23 : f32 to vector<16x32xf32>
      %39 = arith.addf %37, %38 : vector<16x32xf32>
      %40 = arith.mulf %39, %32 : vector<16x32xf32>
      %cst_24 = arith.constant -0.284496725 : f32
      %41 = vector.broadcast %cst_24 : f32 to vector<16x32xf32>
      %42 = arith.addf %40, %41 : vector<16x32xf32>
      %43 = arith.mulf %42, %32 : vector<16x32xf32>
      %cst_25 = arith.constant 0.254829586 : f32
      %44 = vector.broadcast %cst_25 : f32 to vector<16x32xf32>
      %45 = arith.addf %43, %44 : vector<16x32xf32>
      %46 = arith.mulf %45, %32 : vector<16x32xf32>
      %cst_26 = arith.constant 0.000000e+00 : f32
      %47 = vector.broadcast %cst_26 : f32 to vector<16x32xf32>
      %48 = arith.subf %47, %23 : vector<16x32xf32>
      %49 = arith.mulf %48, %23 : vector<16x32xf32>
      %50 = math.exp %49 : vector<16x32xf32>
      %51 = arith.mulf %46, %50 : vector<16x32xf32>
      %cst_27 = arith.constant 1.000000e+00 : f32
      %52 = vector.broadcast %cst_27 : f32 to vector<16x32xf32>
      %53 = arith.subf %52, %51 : vector<16x32xf32>
      %54 = arith.mulf %22, %53 : vector<16x32xf32>
      %cst_28 = arith.constant 1.000000e+00 : f32
      %55 = vector.broadcast %cst_28 : f32 to vector<16x32xf32>
      %56 = arith.addf %55, %54 : vector<16x32xf32>
      %57 = arith.mulf %15, %56 : vector<16x32xf32>
      %cst_29 = arith.constant dense<0.000000e+00> : vector<16xf32>
      %58 = vector.multi_reduction <add>, %57, %cst_29 [1] : vector<16x32xf32> to vector<16xf32>
      %59 = vector.shape_cast %58 : vector<16xf32> to vector<16x1xf32>
      %cst_30 = arith.constant 3.200000e+01 : f32
      %60 = vector.broadcast %cst_30 : f32 to vector<16x1xf32>
      %61 = arith.divf %59, %60 : vector<16x1xf32>
      %62 = vector.broadcast %61 : vector<16x1xf32> to vector<16x32xf32>
      %63 = arith.subf %57, %62 : vector<16x32xf32>
      %64 = arith.mulf %63, %63 : vector<16x32xf32>
      %cst_31 = arith.constant dense<0.000000e+00> : vector<16xf32>
      %65 = vector.multi_reduction <add>, %64, %cst_31 [1] : vector<16x32xf32> to vector<16xf32>
      %66 = vector.shape_cast %65 : vector<16xf32> to vector<16x1xf32>
      %cst_32 = arith.constant 3.200000e+01 : f32
      %67 = vector.broadcast %cst_32 : f32 to vector<16x1xf32>
      %68 = arith.divf %66, %67 : vector<16x1xf32>
      %cst_33 = arith.constant 9.99999996E-13 : f32
      %69 = vector.broadcast %cst_33 : f32 to vector<16x1xf32>
      %70 = arith.addf %68, %69 : vector<16x1xf32>
      %71 = math.rsqrt %70 : vector<16x1xf32>
      %72 = vector.broadcast %71 : vector<16x1xf32> to vector<16x32xf32>
      %73 = arith.mulf %63, %72 : vector<16x32xf32>
      %c1 = arith.constant 1 : index
      %c0_34 = arith.constant 0 : index
      %74 = vector.load %arg4[%c1, %c0_34] : memref<8x32xf32, #tpu.memory_space<vmem>>, vector<1x32xf32>
      %75 = vector.broadcast %74 : vector<1x32xf32> to vector<16x32xf32>
      %76 = arith.mulf %73, %75 : vector<16x32xf32>
      %c2 = arith.constant 2 : index
      %c0_35 = arith.constant 0 : index
      %77 = vector.load %arg4[%c2, %c0_35] : memref<8x32xf32, #tpu.memory_space<vmem>>, vector<1x32xf32>
      %78 = vector.broadcast %77 : vector<1x32xf32> to vector<16x32xf32>
      %79 = arith.addf %76, %78 : vector<16x32xf32>
      %c0_36 = arith.constant 0 : index
      %c0_37 = arith.constant 0 : index
      %80 = vector.load %arg7[%c0_36, %c0_37] : memref<16x32xf32, #tpu.memory_space<vmem>>, vector<16x32xf32>
      tpu.vector_store %arg7[%c0_36, %c0_37], %79 {strides = array<i32>} : memref<16x32xf32, #tpu.memory_space<vmem>>, vector<16x32xf32>,
      %81 = arith.truncf %79 : vector<16x32xf32> to vector<16x32xbf16>
      %c0_38 = arith.constant 0 : index
      %c0_39 = arith.constant 0 : index
      %82 = vector.load %arg8[%c0_38, %c0_39] : memref<16x32xbf16, #tpu.memory_space<vmem>>, vector<16x32xbf16>
      tpu.vector_store %arg8[%c0_38, %c0_39], %81 {strides = array<i32>} : memref<16x32xbf16, #tpu.memory_space<vmem>>, vector<16x32xbf16>,
    } else {
    }
    %c0 = arith.constant 0 : index
    %c0_1 = arith.constant 0 : index
    %3 = vector.load %arg8[%c0, %c0_1] : memref<16x32xbf16, #tpu.memory_space<vmem>>, vector<16x32xbf16>
    %c0_2 = arith.constant 0 : index
    %c0_3 = arith.constant 0 : index
    %4 = vector.load %arg5[%c0_2, %c0_3] : memref<32x128xbf16, #tpu.memory_space<vmem>>, vector<32x128xbf16>
    %cst = arith.constant dense<0.000000e+00> : vector<16x128xf32>
    %5 = tpu.matmul %3, %4, %cst {dimension_numbers = #tpu.dot_dimension_numbers<[1], [0], [0], [1], [0, 0, 1, 1], [], []>} : vector<16x32xbf16>, vector<32x128xbf16>, vector<16x128xf32> -> vector<16x128xf32>
    %c0_4 = arith.constant 0 : index
    %c0_5 = arith.constant 0 : index
    %6 = vector.load %arg6[%c0_4, %c0_5] : memref<16x128xf32, #tpu.memory_space<vmem>>, vector<16x128xf32>
    tpu.vector_store %arg6[%c0_4, %c0_5], %5 {strides = array<i32>} : memref<16x128xf32, #tpu.memory_space<vmem>>, vector<16x128xf32>,
    return
  }
  func.func @transform_0(%arg0: i32, %arg1: i32) -> (i32, i32) {
    %c0_i32 = arith.constant 0 : i32
    %c0_i32_0 = arith.constant 0 : i32
    return %arg0, %c0_i32 : i32, i32
  }
  func.func @transform_1(%arg0: i32, %arg1: i32) -> (i32, i32) {
    %c0_i32 = arith.constant 0 : i32
    %c0_i32_0 = arith.constant 0 : i32
    %c0_i32_1 = arith.constant 0 : i32
    return %c0_i32, %c0_i32_0 : i32, i32
  }
  func.func @transform_2(%arg0: i32, %arg1: i32) -> (i32, i32) {
    %c0_i32 = arith.constant 0 : i32
    %c0_i32_0 = arith.constant 0 : i32
    %c0_i32_1 = arith.constant 0 : i32
    return %c0_i32, %c0_i32_0 : i32, i32
  }
  func.func @transform_3(%arg0: i32, %arg1: i32) -> (i32, i32) {
    %c0_i32 = arith.constant 0 : i32
    %c0_i32_0 = arith.constant 0 : i32
    return %c0_i32, %arg1 : i32, i32
  }
  func.func @transform_4(%arg0: i32, %arg1: i32) -> (i32, i32) {
    %c0_i32 = arith.constant 0 : i32
    return %arg0, %arg1 : i32, i32
  }
  func.func @transform_5(%arg0: i32, %arg1: i32) -> (i32, i32) {
    %c0_i32 = arith.constant 0 : i32
    %c0_i32_0 = arith.constant 0 : i32
    return %arg0, %c0_i32 : i32, i32
  }
}

module attributes {stable_mosaic.version = 11 : i64} {
  func.func @_lm_head_kernel(%arg0: i32, %arg1: i32, %arg2: memref<16x32xf32, #tpu.memory_space<vmem>>, %arg3: memref<32x32xbf16, #tpu.memory_space<vmem>>, %arg4: memref<8x32xf32, #tpu.memory_space<vmem>>, %arg5: memref<32x128xbf16, #tpu.memory_space<vmem>>, %arg6: memref<16x128xf32, #tpu.memory_space<vmem>>, %arg7: memref<16x32xf32, #tpu.memory_space<vmem>>, %arg8: memref<16x32xbf16, #tpu.memory_space<vmem>>) attributes {dimension_semantics = [#tpu.dimension_semantics<parallel>, #tpu.dimension_semantics<arbitrary>], iteration_bounds = array<i64: 1, 1>, scalar_prefetch = 0 : i64, scratch_operands = 1 : i64, tpu.core_type = #tpu.core_type<tc>, window_params = [{transform_indices = @transform_0, window_bounds = array<i64: 16, 32>}, {pipeline_mode = #tpu.pipeline_mode<synchronous>, transform_indices = @transform_1, window_bounds = array<i64: 32, 32>}, {pipeline_mode = #tpu.pipeline_mode<synchronous>, transform_indices = @transform_2, window_bounds = array<i64: 8, 32>}, {transform_indices = @transform_3, window_bounds = array<i64: 32, 128>}, {transform_indices = @transform_4, window_bounds = array<i64: 16, 128>}, {transform_indices = @transform_5, window_bounds = array<i64: 16, 32>}]} {
    %c0_i32 = arith.constant 0 : i32
    %0 = arith.cmpi eq, %arg1, %c0_i32 : i32
    %1 = arith.extui %0 : i1 to i32
    %c0_i32_0 = arith.constant 0 : i32
    %2 = arith.cmpi ne, %1, %c0_i32_0 : i32
    scf.if %2 {
      %c0_6 = arith.constant 0 : index
      %c0_7 = arith.constant 0 : index
      %7 = vector.load %arg2[%c0_6, %c0_7] : memref<16x32xf32, #tpu.memory_space<vmem>>, vector<16x32xf32>
      %8 = arith.truncf %7 : vector<16x32xf32> to vector<16x32xbf16>
      %c0_8 = arith.constant 0 : index
      %c0_9 = arith.constant 0 : index
      %9 = vector.load %arg3[%c0_8, %c0_9] : memref<32x32xbf16, #tpu.memory_space<vmem>>, vector<32x32xbf16>
      %cst_10 = arith.constant dense<0.000000e+00> : vector<16x32xf32>
      %10 = tpu.matmul %8, %9, %cst_10 {dimension_numbers = #tpu.dot_dimension_numbers<[1], [0], [0], [1], [0, 0, 1, 1], [], []>} : vector<16x32xbf16>, vector<32x32xbf16>, vector<16x32xf32> -> vector<16x32xf32>
      %c0_11 = arith.constant 0 : index
      %c0_12 = arith.constant 0 : index
      %11 = vector.load %arg4[%c0_11, %c0_12] : memref<8x32xf32, #tpu.memory_space<vmem>>, vector<1x32xf32>
      %12 = vector.broadcast %11 : vector<1x32xf32> to vector<16x32xf32>
      %13 = arith.addf %10, %12 : vector<16x32xf32>
      %cst_13 = arith.constant 5.000000e-01 : f32
      %14 = vector.broadcast %cst_13 : f32 to vector<16x32xf32>
      %15 = arith.mulf %14, %13 : vector<16x32xf32>
      %cst_14 = arith.constant 0.707106769 : f32
      %16 = vector.broadcast %cst_14 : f32 to vector<16x32xf32>
      %17 = arith.mulf %13, %16 : vector<16x32xf32>
      %cst_15 = arith.constant 0.000000e+00 : f32
      %18 = vector.broadcast %cst_15 : f32 to vector<16x32xf32>
      %19 = arith.cmpf oge, %17, %18 : vector<16x32xf32>
      %cst_16 = arith.constant 1.000000e+00 : f32
      %cst_17 = arith.constant -1.000000e+00 : f32
      %20 = vector.broadcast %cst_16 : f32 to vector<16x32xf32>
      %21 = vector.broadcast %cst_17 : f32 to vector<16x32xf32>
      %22 = arith.select %19, %20, %21 : vector<16x32xi1>, vector<16x32xf32>
      %23 = math.absf %17 : vector<16x32xf32>
      %cst_18 = arith.constant 0.327591091 : f32
      %24 = vector.broadcast %cst_18 : f32 to vector<16x32xf32>
      %25 = arith.mulf %24, %23 : vector<16x32xf32>
      %cst_19 = arith.constant 1.000000e+00 : f32
      %26 = vector.broadcast %cst_19 : f32 to vector<16x32xf32>
      %27 = arith.addf %26, %25 : vector<16x32xf32>
      %28 = tpu.reciprocal %27 {approx = true} : vector<16x32xf32> -> vector<16x32xf32>
      %29 = arith.mulf %27, %28 : vector<16x32xf32>
      %cst_20 = arith.constant 2.000000e+00 : f32
      %30 = vector.broadcast %cst_20 : f32 to vector<16x32xf32>
      %31 = arith.subf %30, %29 : vector<16x32xf32>
      %32 = arith.mulf %28, %31 : vector<16x32xf32>
      %cst_21 = arith.constant 1.06140542 : f32
      %33 = vector.broadcast %cst_21 : f32 to vector<16x32xf32>
      %34 = arith.mulf %33, %32 : vector<16x32xf32>
      %cst_22 = arith.constant -1.45315206 : f32
      %35 = vector.broadcast %cst_22 : f32 to vector<16x32xf32>
      %36 = arith.addf %34, %35 : vector<16x32xf32>
      %37 = arith.mulf %36, %32 : vector<16x32xf32>
      %cst_23 = arith.constant 1.42141378 : f32
      %38 = vector.broadcast %cst_23 : f32 to vector<16x32xf32>
      %39 = arith.addf %37, %38 : vector<16x32xf32>
      %40 = arith.mulf %39, %32 : vector<16x32xf32>
      %cst_24 = arith.constant -0.284496725 : f32
      %41 = vector.broadcast %cst_24 : f32 to vector<16x32xf32>
      %42 = arith.addf %40, %41 : vector<16x32xf32>
      %43 = arith.mulf %42, %32 : vector<16x32xf32>
      %cst_25 = arith.constant 0.254829586 : f32
      %44 = vector.broadcast %cst_25 : f32 to vector<16x32xf32>
      %45 = arith.addf %43, %44 : vector<16x32xf32>
      %46 = arith.mulf %45, %32 : vector<16x32xf32>
      %cst_26 = arith.constant 0.000000e+00 : f32
      %47 = vector.broadcast %cst_26 : f32 to vector<16x32xf32>
      %48 = arith.subf %47, %23 : vector<16x32xf32>
      %49 = arith.mulf %48, %23 : vector<16x32xf32>
      %50 = math.exp %49 : vector<16x32xf32>
      %51 = arith.mulf %46, %50 : vector<16x32xf32>
      %cst_27 = arith.constant 1.000000e+00 : f32
      %52 = vector.broadcast %cst_27 : f32 to vector<16x32xf32>
      %53 = arith.subf %52, %51 : vector<16x32xf32>
      %54 = arith.mulf %22, %53 : vector<16x32xf32>
      %cst_28 = arith.constant 1.000000e+00 : f32
      %55 = vector.broadcast %cst_28 : f32 to vector<16x32xf32>
      %56 = arith.addf %55, %54 : vector<16x32xf32>
      %57 = arith.mulf %15, %56 : vector<16x32xf32>
      %cst_29 = arith.constant dense<0.000000e+00> : vector<16xf32>
      %58 = vector.multi_reduction <add>, %57, %cst_29 [1] : vector<16x32xf32> to vector<16xf32>
      %59 = vector.shape_cast %58 : vector<16xf32> to vector<16x1xf32>
      %cst_30 = arith.constant 3.200000e+01 : f32
      %60 = vector.broadcast %cst_30 : f32 to vector<16x1xf32>
      %61 = arith.divf %59, %60 : vector<16x1xf32>
      %62 = vector.broadcast %61 : vector<16x1xf32> to vector<16x32xf32>
      %63 = arith.subf %57, %62 : vector<16x32xf32>
      %64 = arith.mulf %63, %63 : vector<16x32xf32>
      %cst_31 = arith.constant dense<0.000000e+00> : vector<16xf32>
      %65 = vector.multi_reduction <add>, %64, %cst_31 [1] : vector<16x32xf32> to vector<16xf32>
      %66 = vector.shape_cast %65 : vector<16xf32> to vector<16x1xf32>
      %cst_32 = arith.constant 3.200000e+01 : f32
      %67 = vector.broadcast %cst_32 : f32 to vector<16x1xf32>
      %68 = arith.divf %66, %67 : vector<16x1xf32>
      %cst_33 = arith.constant 9.99999996E-13 : f32
      %69 = vector.broadcast %cst_33 : f32 to vector<16x1xf32>
      %70 = arith.addf %68, %69 : vector<16x1xf32>
      %71 = math.rsqrt %70 : vector<16x1xf32>
      %72 = vector.broadcast %71 : vector<16x1xf32> to vector<16x32xf32>
      %73 = arith.mulf %63, %72 : vector<16x32xf32>
      %c1 = arith.constant 1 : index
      %c0_34 = arith.constant 0 : index
      %74 = vector.load %arg4[%c1, %c0_34] : memref<8x32xf32, #tpu.memory_space<vmem>>, vector<1x32xf32>
      %75 = vector.broadcast %74 : vector<1x32xf32> to vector<16x32xf32>
      %76 = arith.mulf %73, %75 : vector<16x32xf32>
      %c2 = arith.constant 2 : index
      %c0_35 = arith.constant 0 : index
      %77 = vector.load %arg4[%c2, %c0_35] : memref<8x32xf32, #tpu.memory_space<vmem>>, vector<1x32xf32>
      %78 = vector.broadcast %77 : vector<1x32xf32> to vector<16x32xf32>
      %79 = arith.addf %76, %78 : vector<16x32xf32>
      %c0_36 = arith.constant 0 : index
      %c0_37 = arith.constant 0 : index
      %80 = vector.load %arg7[%c0_36, %c0_37] : memref<16x32xf32, #tpu.memory_space<vmem>>, vector<16x32xf32>
      tpu.vector_store %arg7[%c0_36, %c0_37], %79 {strides = array<i32>} : memref<16x32xf32, #tpu.memory_space<vmem>>, vector<16x32xf32>,
      %81 = arith.truncf %79 : vector<16x32xf32> to vector<16x32xbf16>
      %c0_38 = arith.constant 0 : index
      %c0_39 = arith.constant 0 : index
      %82 = vector.load %arg8[%c0_38, %c0_39] : memref<16x32xbf16, #tpu.memory_space<vmem>>, vector<16x32xbf16>
      tpu.vector_store %arg8[%c0_38, %c0_39], %81 {strides = array<i32>} : memref<16x32xbf16, #tpu.memory_space<vmem>>, vector<16x32xbf16>,
    } else {
    }
    %c0 = arith.constant 0 : index
    %c0_1 = arith.constant 0 : index
    %3 = vector.load %arg8[%c0, %c0_1] : memref<16x32xbf16, #tpu.memory_space<vmem>>, vector<16x32xbf16>
    %c0_2 = arith.constant 0 : index
    %c0_3 = arith.constant 0 : index
    %4 = vector.load %arg5[%c0_2, %c0_3] : memref<32x128xbf16, #tpu.memory_space<vmem>>, vector<32x128xbf16>
    %cst = arith.constant dense<0.000000e+00> : vector<16x128xf32>
    %5 = tpu.matmul %3, %4, %cst {dimension_numbers = #tpu.dot_dimension_numbers<[1], [0], [0], [1], [0, 0, 1, 1], [], []>} : vector<16x32xbf16>, vector<32x128xbf16>, vector<16x128xf32> -> vector<16x128xf32>
    %c0_4 = arith.constant 0 : index
    %c0_5 = arith.constant 0 : index
    %6 = vector.load %arg6[%c0_4, %c0_5] : memref<16x128xf32, #tpu.memory_space<vmem>>, vector<16x128xf32>
    tpu.vector_store %arg6[%c0_4, %c0_5], %5 {strides = array<i32>} : memref<16x128xf32, #tpu.memory_space<vmem>>, vector<16x128xf32>,
    return
  }
  func.func @transform_0(%arg0: i32, %arg1: i32) -> (i32, i32) {
    %c0_i32 = arith.constant 0 : i32
    %c0_i32_0 = arith.constant 0 : i32
    return %arg0, %c0_i32 : i32, i32
  }
  func.func @transform_1(%arg0: i32, %arg1: i32) -> (i32, i32) {
    %c0_i32 = arith.constant 0 : i32
    %c0_i32_0 = arith.constant 0 : i32
    %c0_i32_1 = arith.constant 0 : i32
    return %c0_i32, %c0_i32_0 : i32, i32
  }
  func.func @transform_2(%arg0: i32, %arg1: i32) -> (i32, i32) {
    %c0_i32 = arith.constant 0 : i32
    %c0_i32_0 = arith.constant 0 : i32
    %c0_i32_1 = arith.constant 0 : i32
    return %c0_i32, %c0_i32_0 : i32, i32
  }
  func.func @transform_3(%arg0: i32, %arg1: i32) -> (i32, i32) {
    %c0_i32 = arith.constant 0 : i32
    %c0_i32_0 = arith.constant 0 : i32
    return %c0_i32, %arg1 : i32, i32
  }
  func.func @transform_4(%arg0: i32, %arg1: i32) -> (i32, i32) {
    %c0_i32 = arith.constant 0 : i32
    return %arg0, %arg1 : i32, i32
  }
  func.func @transform_5(%arg0: i32, %arg1: i32) -> (i32, i32) {
    %c0_i32 = arith.constant 0 : i32
    %c0_i32_0 = arith.constant 0 : i32
    return %arg0, %c0_i32 : i32, i32
  }
}

</mosaic_0001>

<llo_original>
// kernel: tpu_custom_call.1
$region0: #{tpu_custom_call.1}
  #allocation0 [shape = 'u32[]', space=smem, size = 0x4, offset = 0x4, fixed_abs, tag = 'smem constant byte address 0x4 - core index']
  #allocation1 [shape = 'u32[144,128]{1,0:T(1,128)}', space=vmem, size = 0x12000, scoped, tag = 'internal scratch']
  #allocation2 [shape = 'bf16[16,32]{1,0:T(16,128)(2,1)}', space=vmem, size = 0x1000, scoped, tag = 'scratch operand']
  %s0 = inlined_call_operand.hbm [shape: f32[16,32], index: 0, kind: input, shape index: {}]
  %s1 = inlined_call_operand.hbm [shape: bf16[32,32], index: 1, kind: input, shape index: {}]
  %s2 = inlined_call_operand.hbm [shape: f32[8,32], index: 2, kind: input, shape index: {}]
  %s3 = inlined_call_operand.hbm [shape: bf16[32,128], index: 3, kind: input, shape index: {}]
  %s4 = inlined_call_operand.hbm [shape: f32[16,128], index: 4, kind: output, shape index: {0}]
  %s5 = inlined_call_operand.hbm [shape: f32[16,32], index: 5, kind: output, shape index: {1}]
  %6 = xla_tuple %s4, %s5
  %s7 = sld [smem:[#allocation0]]
  $region54: #{tpu_custom_call.1} parent=0
    _
  %s9 = ssub.s32 1, %s7
  %s10 = scalar_select 0, %s9, %s7
  $region1: #{tpu_custom_call.1} parent=0
    #allocation3 [shape = 'u8[8192]{0}', space=vmem, size = 0x2000, scoped, tag = 'input window, operand 0, single buffered']
    #allocation4 [shape = 's32[1]{0}', space=sflag, size = 0x4, scoped, tag = 'scoped memory for tpu_custom_call.1']
    #allocation5 [shape = 's32[1]{0}', space=sflag, size = 0x4, scoped, tag = 'scoped memory for tpu_custom_call.1']
    #allocation6 [shape = 'u8[8192]{0}', space=vmem, size = 0x2000, scoped, tag = 'input window, operand 1, single buffered']
    #allocation7 [shape = 's32[1]{0}', space=sflag, size = 0x4, scoped, tag = 'scoped memory for tpu_custom_call.1']
    #allocation8 [shape = 'u8[4096]{0}', space=vmem, size = 0x1000, scoped, tag = 'input window, operand 2, single buffered']
    #allocation9 [shape = 'u8[8192]{0}', space=vmem, size = 0x2000, scoped, tag = 'input window, operand 3, single buffered']
    #allocation10 [shape = 's32[1]{0}', space=sflag, size = 0x4, scoped, tag = 'scoped memory for tpu_custom_call.1']
    #allocation11 [shape = 'u8[8192]{0}', space=vmem, size = 0x2000, scoped, tag = 'output window, operand 0, single buffered']
    #allocation12 [shape = 'u8[8192]{0}', space=vmem, size = 0x2000, scoped, tag = 'output window, operand 1, single buffered']
    #allocation13 [shape = 's32[1]{0}', space=sflag, size = 0x4, scoped, tag = 'scoped memory for tpu_custom_call.1']
    %11 = vsyncpa [#allocation4], 0
    %12 = vsyncpa [#allocation7], 0
    %13 = vsyncpa [#allocation10], 0
    %14 = vsyncpa [#allocation5], 0
    %15 = vsyncpa [#allocation13], 0
    // Predicated region
    $region2: #{tpu_custom_call.1} parent=1 // pred_check
      _
    $region3: #{tpu_custom_call.1} parent=1 // pred_check_branch
      %17 = sbr.rel (0) target = $region5
    $region4: #{tpu_custom_call.1} parent=1 // pred_region
      %s19 = ssub.s32 256, 256
      %20 = vsyncadd [#allocation4], %s19
      %s21 = sshll.u32 [#allocation3], 4
      %s22 = int_to_ptr.vmem [resolvable:$true] %s21
      %27 = dma.hbm_to_vmem [thread:$0]  %s0, 256, %s22, [#allocation4], 128, 128, 8
    $region5: #{tpu_custom_call.1} parent=1 // pred_fallthru
      _
    // Predicated region
    $region6: #{tpu_custom_call.1} parent=1 // pred_check
      _
    $region7: #{tpu_custom_call.1} parent=1 // pred_check_branch
      %29 = sbr.rel (0) target = $region9
    $region8: #{tpu_custom_call.1} parent=1 // pred_region
      %s31 = ssub.s32 256, 256
      %32 = vsyncadd [#allocation7], %s31
      %s33 = sshll.u32 [#allocation6], 4
      %s34 = int_to_ptr.vmem [resolvable:$true] %s33
      %39 = dma.hbm_to_vmem [thread:$0]  %s1, 256, %s34, [#allocation7], 64, 64, 4
    $region9: #{tpu_custom_call.1} parent=1 // pred_fallthru
      _
    // Predicated region
    $region10: #{tpu_custom_call.1} parent=1 // pred_check
      _
    $region11: #{tpu_custom_call.1} parent=1 // pred_check_branch
      %41 = sbr.rel (0) target = $region13
    $region12: #{tpu_custom_call.1} parent=1 // pred_region
      %s43 = ssub.s32 128, 128
      %44 = vsyncadd [#allocation7], %s43
      %s46 = sshll.u32 [#allocation8], 4
      %s47 = int_to_ptr.vmem [resolvable:$true] %s46
      %49 = dma.hbm_to_vmem [thread:$0]  %s2, 128, %s47, [#allocation7]
    $region13: #{tpu_custom_call.1} parent=1 // pred_fallthru
      _
    // Predicated region
    $region14: #{tpu_custom_call.1} parent=1 // pred_check
      _
    $region15: #{tpu_custom_call.1} parent=1 // pred_check_branch
      %51 = sbr.rel (0) target = $region17
    $region16: #{tpu_custom_call.1} parent=1 // pred_region
      %s53 = ssub.s32 256, 256
      %54 = vsyncadd [#allocation10], %s53
      %s55 = sshll.u32 [#allocation9], 4
      %s56 = int_to_ptr.vmem [resolvable:$true] %s55
      %61 = dma.hbm_to_vmem [thread:$0]  %s3, 256, %s56, [#allocation10], 64, 64, 4
    $region17: #{tpu_custom_call.1} parent=1 // pred_fallthru
      _
    // Predicated region
    $region18: #{tpu_custom_call.1} parent=1 // pred_check
      _
    $region19: #{tpu_custom_call.1} parent=1 // pred_check_branch
      %63 = sbr.rel (0) target = $region21
    $region20: #{tpu_custom_call.1} parent=1 // pred_region
      %64 = dma.done [#allocation4], 256
    $region21: #{tpu_custom_call.1} parent=1 // pred_fallthru
      _
    // Predicated region
    $region22: #{tpu_custom_call.1} parent=1 // pred_check
      _
    $region23: #{tpu_custom_call.1} parent=1 // pred_check_branch
      %66 = sbr.rel (0) target = $region25
    $region24: #{tpu_custom_call.1} parent=1 // pred_region
      %67 = dma.done [#allocation7], 256
    $region25: #{tpu_custom_call.1} parent=1 // pred_fallthru
      _
    // Predicated region
    $region26: #{tpu_custom_call.1} parent=1 // pred_check
      _
    $region27: #{tpu_custom_call.1} parent=1 // pred_check_branch
      %69 = sbr.rel (0) target = $region29
    $region28: #{tpu_custom_call.1} parent=1 // pred_region
      %70 = dma.done [#allocation7], 128
    $region29: #{tpu_custom_call.1} parent=1 // pred_fallthru
      _
    // Predicated region
    $region30: #{tpu_custom_call.1} parent=1 // pred_check
      _
    $region31: #{tpu_custom_call.1} parent=1 // pred_check_branch
      %72 = sbr.rel (0) target = $region33
    $region32: #{tpu_custom_call.1} parent=1 // pred_region
      %73 = dma.done [#allocation10], 256
    $region33: #{tpu_custom_call.1} parent=1 // pred_fallthru
      _
    %p75 = scmp.eq.s32.totalorder 0, 0
    // Predicated region
    $region34: #{tpu_custom_call.1} parent=1 // pred_check
      %p76 = pneg %p75
    $region35: #{tpu_custom_call.1} parent=1 // pred_check_branch
      %78 = sbr.rel (%p76) target = $region37
    $region36: #{tpu_custom_call.1} parent=1 // pred_region
      %v79 = vld [vmem:[#allocation3] sm:$0xff]
      %v80 = vld [vmem:[#allocation3 + $0x8] sm:$0xff]
      %v81 = vpack.c.bf16 %v80, %v79
      %v82 = vld [vmem:[#allocation6] sm:$0xf]
      %v83 = vld [vmem:[#allocation6 + $0x4] sm:$0xf]
      %v84 = vld [vmem:[#allocation6 + $0x8] sm:$0xf]
      %v85 = vld [vmem:[#allocation6 + $0xc] sm:$0xf]
      %v86 = vld [vmem:[#allocation8] sm:$0x1]
      %v87 = vlaneseq
      %v88 = vshrl.u32 %v87, 7
      %v89 = vsub.s32 0, %v88
      %v90 = vrot.slane %v86, %v89
      %v95 = vunpack.c.l.b16 %v82
      %v96 = vunpack.c.l.b16 %v83
      %v97 = vunpack.c.l.b16 %v84
      %v98 = vunpack.c.l.b16 %v85
      %v99 = vpack.c.b16 %v96, %v95
      %v100 = vpack.c.b16 %v98, %v97
      %vm103 = vcmask 261120
      %v105 = vsel %vm103, %v81, 0
      %107 = vmatprep.subr.bf16.mxu0 0
      %108 = vmatpush1.bf16.msra.mxu0 %v99
      %109 = vmatprep.subr.bf16.mxu0 0
      %110 = vmatpush1.bf16.msra.mxu0 %v100
      %111 = vmatprep.subr.bf16.mxu0 0
      %112 = vmatpush1.bf16.msra.mxu0 0
      %113 = vmatprep.subr.bf16.mxu0 0
      %114 = vmatpush1.bf16.msra.mxu0 0
      %115 = vmatprep.subr.bf16.mxu0 0
      %116 = vmatpush1.bf16.msra.mxu0 0
      %117 = vmatprep.subr.bf16.mxu0 0
      %118 = vmatpush1.bf16.msra.mxu0 0
      %119 = vmatprep.subr.bf16.mxu0 0
      %120 = vmatpush1.bf16.msra.mxu0 0
      %121 = vmatprep.subr.bf16.mxu0 0
      %122 = vmatpush1.bf16.msra.mxu0 0
      %123 = vmatprep.subr.bf16.mxu0 0
      %124 = vmatpush1.bf16.msra.mxu0 0
      %125 = vmatprep.subr.bf16.mxu0 0
      %126 = vmatpush1.bf16.msra.mxu0 0
      %127 = vmatprep.subr.bf16.mxu0 0
      %128 = vmatpush1.bf16.msra.mxu0 0
      %129 = vmatprep.subr.bf16.mxu0 0
      %130 = vmatpush1.bf16.msra.mxu0 0
      %131 = vmatprep.subr.bf16.mxu0 0
      %132 = vmatpush1.bf16.msra.mxu0 0
      %133 = vmatprep.subr.bf16.mxu0 0
      %134 = vmatpush1.bf16.msra.mxu0 0
      %135 = vmatprep.subr.bf16.mxu0 0
      %136 = vmatpush1.bf16.msra.mxu0 0
      %137 = vmatprep.subr.bf16.mxu0 0
      %138 = vmatpush1.bf16.msra.mxu0 0
      %139 = vmatprep.mubr.bf16.mxu0 0
      %140 = vmatmul.mubr.bf16.gmra.mrb[0].mxu0 %v105
      %v141 = vpop.f32.mrb[0].mxu0
      %v142 = vadd.f32 %v90, %v141
      %v143 = vpop.f32.mrb[0].mxu0
      %v144 = vpop.f32.mrb[0].mxu0
      %v145 = vadd.f32 %v90, %v144
      %v146 = vpop.f32.mrb[0].mxu0
      %147 = vdwg.mxu0
      %v148 = vmul.f32 %v142, 0.5
      %v149 = vmul.f32 %v145, 0.5
      %v150 = vmul.f32 %v142, 0.70710677
      %v151 = vmul.f32 %v145, 0.70710677
      %vm152 = vcmp.ge.f32.partialorder %v150, 0.0
      %vm153 = vcmp.ge.f32.partialorder %v151, 0.0
      %v154 = vsel %vm152, 1.0, -1.0
      %v155 = vsel %vm153, 1.0, -1.0
      %v156 = vand.u32 2147483647, %v150
      %v157 = vand.u32 2147483647, %v151
      %v158 = vmul.f32 %v156, 0.3275911
      %v159 = vmul.f32 %v157, 0.3275911
      %v160 = vadd.f32 %v158, 1.0
      %v161 = vadd.f32 %v159, 1.0
      %v162 = vrcp.pop %v160
      %v163 = vrcp.pop %v161
      %v164 = vmul.f32 %v160, %v162
      %v165 = vmul.f32 %v161, %v163
      %v166 = vsub.f32 2.0, %v164
      %v167 = vsub.f32 2.0, %v165
      %v168 = vmul.f32 %v162, %v166
      %v169 = vmul.f32 %v163, %v167
      %v170 = vmul.f32 %v168, 1.0614054
      %v171 = vmul.f32 %v169, 1.0614054
      %v172 = vadd.f32 %v170, -1.4531521
      %v173 = vadd.f32 %v171, -1.4531521
      %v174 = vmul.f32 %v172, %v168
      %v175 = vmul.f32 %v173, %v169
      %v176 = vadd.f32 %v174, 1.4214138
      %v177 = vadd.f32 %v175, 1.4214138
      %v178 = vmul.f32 %v176, %v168
      %v179 = vmul.f32 %v177, %v169
      %v180 = vadd.f32 %v178, -0.28449672
      %v181 = vadd.f32 %v179, -0.28449672
      %v182 = vmul.f32 %v180, %v168
      %v183 = vmul.f32 %v181, %v169
      %v184 = vadd.f32 %v182, 0.2548296
      %v185 = vadd.f32 %v183, 0.2548296
      %v186 = vmul.f32 %v184, %v168
      %v187 = vmul.f32 %v185, %v169
      %v188 = vsub.f32 0.0, %v156
      %v189 = vsub.f32 0.0, %v157
      %v190 = vmul.f32 %v188, %v156
      %v191 = vmul.f32 %v189, %v157
      %v192 = vmul.f32 %v190, 1.442695
      %v193 = vpow.pop %v192
      %v194 = vmul.f32 %v191, 1.442695
      %v195 = vpow.pop %v194
      %v196 = vmul.f32 %v186, %v193
      %v197 = vmul.f32 %v187, %v195
      %v198 = vsub.f32 1.0, %v196
      %v199 = vsub.f32 1.0, %v197
      %v200 = vmul.f32 %v154, %v198
      %v201 = vmul.f32 %v155, %v199
      %v202 = vadd.f32 %v200, 1.0
      %v203 = vadd.f32 %v201, 1.0
      %v204 = vmul.f32 %v148, %v202
      %v205 = vmul.f32 %v149, %v203
      %v206 = vsel %vm103, %v204, 0.0
      %207 = vadd.xlane.f32.xlu0 %v206
      %v208 = vpop.xlane.xlu0 %207
      %v209 = vsel %vm103, %v205, 0.0
      %210 = vadd.xlane.f32.xlu0 %v209
      %v211 = vpop.xlane.xlu0 %210
      %v212 = vrcp.pop 32.0
      %v213 = vmul.f32 %v208, %v212
      %v214 = vmul.f32 %v211, %v212
      %v215 = vsub.f32 %v204, %v213
      %v216 = vsub.f32 %v205, %v214
      %v217 = vmul.f32 %v215, %v215
      %v218 = vmul.f32 %v216, %v216
      %v219 = vsel %vm103, %v217, 0.0
      %220 = vadd.xlane.f32.xlu0 %v219
      %v221 = vpop.xlane.xlu0 %220
      %v222 = vsel %vm103, %v218, 0.0
      %223 = vadd.xlane.f32.xlu0 %v222
      %v224 = vpop.xlane.xlu0 %223
      %v225 = vmul.f32 %v221, %v212
      %v226 = vmul.f32 %v224, %v212
      %v227 = vadd.f32 %v225, 1e-12
      %v228 = vadd.f32 %v226, 1e-12
      %v229 = vrsqrt.pop %v227
      %v230 = vrsqrt.pop %v228
      %v231 = vmul.f32 %v215, %v229
      %v232 = vmul.f32 %v216, %v230
      %v233 = vld [vmem:[#allocation8 + $0x1] sm:$0x1]
      %v234 = vlaneseq
      %v235 = vshrl.u32 %v234, 7
      %v236 = vsub.s32 0, %v235
      %v237 = vrot.slane %v233, %v236
      %v238 = vmul.f32 %v231, %v237
      %v239 = vmul.f32 %v232, %v237
      %v240 = vld [vmem:[#allocation8 + $0x2] sm:$0x1]
      %v241 = vlaneseq
      %v242 = vshrl.u32 %v241, 7
      %v243 = vsub.s32 0, %v242
      %v244 = vrot.slane %v240, %v243
      %v245 = vadd.f32 %v238, %v244
      %v246 = vadd.f32 %v239, %v244
      %247 = vst.msk [vmem:[#allocation12] sm:$0xff] %vm103, %v245
      %248 = vst.msk [vmem:[#allocation12 + $0x8] sm:$0xff] %vm103, %v246
      %v249 = vpack.c.bf16 %v246, %v245
      %250 = vst.msk [vmem:[#allocation2] sm:$0xff] %vm103, %v249
    $region37: #{tpu_custom_call.1} parent=1 // pred_fallthru
      _
    %v251 = vld [vmem:[#allocation2] sm:$0xff]
    %v252 = vld [vmem:[#allocation9] sm:$0xf]
    %v253 = vld [vmem:[#allocation9 + $0x4] sm:$0xf]
    %v254 = vld [vmem:[#allocation9 + $0x8] sm:$0xf]
    %v255 = vld [vmem:[#allocation9 + $0xc] sm:$0xf]
    %v260 = vunpack.c.l.b16 %v252
    %v261 = vunpack.c.l.b16 %v253
    %v262 = vunpack.c.l.b16 %v254
    %v263 = vunpack.c.l.b16 %v255
    %v264 = vpack.c.b16 %v261, %v260
    %v265 = vpack.c.b16 %v263, %v262
    %vm268 = vcmask 261120
    %v270 = vsel %vm268, %v251, 0
    %272 = vmatprep.subr.bf16.mxu0 0
    %273 = vmatpush1.bf16.msra.mxu0 %v264
    %274 = vmatprep.subr.bf16.mxu0 0
    %275 = vmatpush1.bf16.msra.mxu0 %v265
    %276 = vmatprep.subr.bf16.mxu0 0
    %277 = vmatpush1.bf16.msra.mxu0 0
    %278 = vmatprep.subr.bf16.mxu0 0
    %279 = vmatpush1.bf16.msra.mxu0 0
    %280 = vmatprep.subr.bf16.mxu0 0
    %281 = vmatpush1.bf16.msra.mxu0 0
    %282 = vmatprep.subr.bf16.mxu0 0
    %283 = vmatpush1.bf16.msra.mxu0 0
    %284 = vmatprep.subr.bf16.mxu0 0
    %285 = vmatpush1.bf16.msra.mxu0 0
    %286 = vmatprep.subr.bf16.mxu0 0
    %287 = vmatpush1.bf16.msra.mxu0 0
    %288 = vmatprep.subr.bf16.mxu0 0
    %289 = vmatpush1.bf16.msra.mxu0 0
    %290 = vmatprep.subr.bf16.mxu0 0
    %291 = vmatpush1.bf16.msra.mxu0 0
    %292 = vmatprep.subr.bf16.mxu0 0
    %293 = vmatpush1.bf16.msra.mxu0 0
    %294 = vmatprep.subr.bf16.mxu0 0
    %295 = vmatpush1.bf16.msra.mxu0 0
    %296 = vmatprep.subr.bf16.mxu0 0
    %297 = vmatpush1.bf16.msra.mxu0 0
    %298 = vmatprep.subr.bf16.mxu0 0
    %299 = vmatpush1.bf16.msra.mxu0 0
    %300 = vmatprep.subr.bf16.mxu0 0
    %301 = vmatpush1.bf16.msra.mxu0 0
    %302 = vmatprep.subr.bf16.mxu0 0
    %303 = vmatpush1.bf16.msra.mxu0 0
    %304 = vmatprep.mubr.bf16.mxu0 0
    %305 = vmatmul.mubr.bf16.gmra.mrb[0].mxu0 %v270
    %v306 = vpop.f32.mrb[0].mxu0
    %v307 = vadd.f32 0.0, %v306
    %v308 = vpop.f32.mrb[0].mxu0
    %v309 = vpop.f32.mrb[0].mxu0
    %v310 = vadd.f32 0.0, %v309
    %v311 = vpop.f32.mrb[0].mxu0
    %312 = vdwg.mxu0
    %313 = vst [vmem:[#allocation11] sm:$0xff] %v307
    %314 = vst [vmem:[#allocation11 + $0x8] sm:$0xff] %v310
    // Predicated region
    $region38: #{tpu_custom_call.1} parent=1 // pred_check
      _
    $region39: #{tpu_custom_call.1} parent=1 // pred_check_branch
      %316 = sbr.rel (0) target = $region41
    $region40: #{tpu_custom_call.1} parent=1 // pred_region
      %s318 = ssub.s32 256, 256
      %319 = vsyncadd [#allocation5], %s318
      %s320 = sshll.u32 [#allocation11], 4
      %s321 = int_to_ptr.vmem [resolvable:$true] %s320
      %326 = dma.vmem_to_hbm [thread:$0]  %s321, 256, %s4, [#allocation5], 128, 128, 8
    $region41: #{tpu_custom_call.1} parent=1 // pred_fallthru
      _
    // Predicated region
    $region42: #{tpu_custom_call.1} parent=1 // pred_check
      _
    $region43: #{tpu_custom_call.1} parent=1 // pred_check_branch
      %328 = sbr.rel (0) target = $region45
    $region44: #{tpu_custom_call.1} parent=1 // pred_region
      %s330 = ssub.s32 256, 256
      %331 = vsyncadd [#allocation13], %s330
      %s332 = sshll.u32 [#allocation12], 4
      %s333 = int_to_ptr.vmem [resolvable:$true] %s332
      %338 = dma.vmem_to_hbm [thread:$0]  %s333, 256, %s5, [#allocation13], 128, 128, 8
    $region45: #{tpu_custom_call.1} parent=1 // pred_fallthru
      _
    // Predicated region
    $region46: #{tpu_custom_call.1} parent=1 // pred_check
      _
    $region47: #{tpu_custom_call.1} parent=1 // pred_check_branch
      %340 = sbr.rel (0) target = $region49
    $region48: #{tpu_custom_call.1} parent=1 // pred_region
      %341 = dma.done [#allocation5], 256
    $region49: #{tpu_custom_call.1} parent=1 // pred_fallthru
      _
    // Predicated region
    $region50: #{tpu_custom_call.1} parent=1 // pred_check
      _
    $region51: #{tpu_custom_call.1} parent=1 // pred_check_branch
      %343 = sbr.rel (0) target = $region53
    $region52: #{tpu_custom_call.1} parent=1 // pred_region
      %344 = dma.done [#allocation13], 256
    $region53: #{tpu_custom_call.1} parent=1 // pred_fallthru
      _
    %345 = vsyncpa [#allocation4], 1
    %346 = vsyncpa [#allocation7], 1
    %347 = vsyncpa [#allocation10], 1
    %348 = vsyncpa [#allocation5], 1
    %349 = vsyncpa [#allocation13], 1

// kernel: tpu_custom_call.1
$region0: #{tpu_custom_call.1}
  #allocation0 [shape = 'u32[]', space=smem, size = 0x4, offset = 0x4, fixed_abs, tag = 'smem constant byte address 0x4 - core index']
  #allocation1 [shape = 'u32[144,128]{1,0:T(1,128)}', space=vmem, size = 0x12000, scoped, tag = 'internal scratch']
  #allocation2 [shape = 'bf16[16,32]{1,0:T(16,128)(2,1)}', space=vmem, size = 0x1000, scoped, tag = 'scratch operand']
  %s0 = inlined_call_operand.hbm [shape: f32[16,32], index: 0, kind: input, shape index: {}]
  %s1 = inlined_call_operand.hbm [shape: bf16[32,32], index: 1, kind: input, shape index: {}]
  %s2 = inlined_call_operand.hbm [shape: f32[8,32], index: 2, kind: input, shape index: {}]
  %s3 = inlined_call_operand.hbm [shape: bf16[32,128], index: 3, kind: input, shape index: {}]
  %s4 = inlined_call_operand.hbm [shape: f32[16,128], index: 4, kind: output, shape index: {0}]
  %s5 = inlined_call_operand.hbm [shape: f32[16,32], index: 5, kind: output, shape index: {1}]
  %6 = xla_tuple %s4, %s5
  %s7 = sld [smem:[#allocation0]]
  $region54: #{tpu_custom_call.1} parent=0
    _
  %s9 = ssub.s32 1, %s7
  %s10 = scalar_select 0, %s9, %s7
  $region1: #{tpu_custom_call.1} parent=0
    #allocation3 [shape = 'u8[8192]{0}', space=vmem, size = 0x2000, scoped, tag = 'input window, operand 0, single buffered']
    #allocation4 [shape = 's32[1]{0}', space=sflag, size = 0x4, scoped, tag = 'scoped memory for tpu_custom_call.1']
    #allocation5 [shape = 's32[1]{0}', space=sflag, size = 0x4, scoped, tag = 'scoped memory for tpu_custom_call.1']
    #allocation6 [shape = 'u8[8192]{0}', space=vmem, size = 0x2000, scoped, tag = 'input window, operand 1, single buffered']
    #allocation7 [shape = 's32[1]{0}', space=sflag, size = 0x4, scoped, tag = 'scoped memory for tpu_custom_call.1']
    #allocation8 [shape = 'u8[4096]{0}', space=vmem, size = 0x1000, scoped, tag = 'input window, operand 2, single buffered']
    #allocation9 [shape = 'u8[8192]{0}', space=vmem, size = 0x2000, scoped, tag = 'input window, operand 3, single buffered']
    #allocation10 [shape = 's32[1]{0}', space=sflag, size = 0x4, scoped, tag = 'scoped memory for tpu_custom_call.1']
    #allocation11 [shape = 'u8[8192]{0}', space=vmem, size = 0x2000, scoped, tag = 'output window, operand 0, single buffered']
    #allocation12 [shape = 'u8[8192]{0}', space=vmem, size = 0x2000, scoped, tag = 'output window, operand 1, single buffered']
    #allocation13 [shape = 's32[1]{0}', space=sflag, size = 0x4, scoped, tag = 'scoped memory for tpu_custom_call.1']
    %11 = vsyncpa [#allocation4], 0
    %12 = vsyncpa [#allocation7], 0
    %13 = vsyncpa [#allocation10], 0
    %14 = vsyncpa [#allocation5], 0
    %15 = vsyncpa [#allocation13], 0
    // Predicated region
    $region2: #{tpu_custom_call.1} parent=1 // pred_check
      _
    $region3: #{tpu_custom_call.1} parent=1 // pred_check_branch
      %17 = sbr.rel (0) target = $region5
    $region4: #{tpu_custom_call.1} parent=1 // pred_region
      %s19 = ssub.s32 256, 256
      %20 = vsyncadd [#allocation4], %s19
      %s21 = sshll.u32 [#allocation3], 4
      %s22 = int_to_ptr.vmem [resolvable:$true] %s21
      %27 = dma.hbm_to_vmem [thread:$0]  %s0, 256, %s22, [#allocation4], 128, 128, 8
    $region5: #{tpu_custom_call.1} parent=1 // pred_fallthru
      _
    // Predicated region
    $region6: #{tpu_custom_call.1} parent=1 // pred_check
      _
    $region7: #{tpu_custom_call.1} parent=1 // pred_check_branch
      %29 = sbr.rel (0) target = $region9
    $region8: #{tpu_custom_call.1} parent=1 // pred_region
      %s31 = ssub.s32 256, 256
      %32 = vsyncadd [#allocation7], %s31
      %s33 = sshll.u32 [#allocation6], 4
      %s34 = int_to_ptr.vmem [resolvable:$true] %s33
      %39 = dma.hbm_to_vmem [thread:$0]  %s1, 256, %s34, [#allocation7], 64, 64, 4
    $region9: #{tpu_custom_call.1} parent=1 // pred_fallthru
      _
    // Predicated region
    $region10: #{tpu_custom_call.1} parent=1 // pred_check
      _
    $region11: #{tpu_custom_call.1} parent=1 // pred_check_branch
      %41 = sbr.rel (0) target = $region13
    $region12: #{tpu_custom_call.1} parent=1 // pred_region
      %s43 = ssub.s32 128, 128
      %44 = vsyncadd [#allocation7], %s43
      %s46 = sshll.u32 [#allocation8], 4
      %s47 = int_to_ptr.vmem [resolvable:$true] %s46
      %49 = dma.hbm_to_vmem [thread:$0]  %s2, 128, %s47, [#allocation7]
    $region13: #{tpu_custom_call.1} parent=1 // pred_fallthru
      _
    // Predicated region
    $region14: #{tpu_custom_call.1} parent=1 // pred_check
      _
    $region15: #{tpu_custom_call.1} parent=1 // pred_check_branch
      %51 = sbr.rel (0) target = $region17
    $region16: #{tpu_custom_call.1} parent=1 // pred_region
      %s53 = ssub.s32 256, 256
      %54 = vsyncadd [#allocation10], %s53
      %s55 = sshll.u32 [#allocation9], 4
      %s56 = int_to_ptr.vmem [resolvable:$true] %s55
      %61 = dma.hbm_to_vmem [thread:$0]  %s3, 256, %s56, [#allocation10], 64, 64, 4
    $region17: #{tpu_custom_call.1} parent=1 // pred_fallthru
      _
    // Predicated region
    $region18: #{tpu_custom_call.1} parent=1 // pred_check
      _
    $region19: #{tpu_custom_call.1} parent=1 // pred_check_branch
      %63 = sbr.rel (0) target = $region21
    $region20: #{tpu_custom_call.1} parent=1 // pred_region
      %64 = dma.done [#allocation4], 256
    $region21: #{tpu_custom_call.1} parent=1 // pred_fallthru
      _
    // Predicated region
    $region22: #{tpu_custom_call.1} parent=1 // pred_check
      _
    $region23: #{tpu_custom_call.1} parent=1 // pred_check_branch
      %66 = sbr.rel (0) target = $region25
    $region24: #{tpu_custom_call.1} parent=1 // pred_region
      %67 = dma.done [#allocation7], 256
    $region25: #{tpu_custom_call.1} parent=1 // pred_fallthru
      _
    // Predicated region
    $region26: #{tpu_custom_call.1} parent=1 // pred_check
      _
    $region27: #{tpu_custom_call.1} parent=1 // pred_check_branch
      %69 = sbr.rel (0) target = $region29
    $region28: #{tpu_custom_call.1} parent=1 // pred_region
      %70 = dma.done [#allocation7], 128
    $region29: #{tpu_custom_call.1} parent=1 // pred_fallthru
      _
    // Predicated region
    $region30: #{tpu_custom_call.1} parent=1 // pred_check
      _
    $region31: #{tpu_custom_call.1} parent=1 // pred_check_branch
      %72 = sbr.rel (0) target = $region33
    $region32: #{tpu_custom_call.1} parent=1 // pred_region
      %73 = dma.done [#allocation10], 256
    $region33: #{tpu_custom_call.1} parent=1 // pred_fallthru
      _
    %p75 = scmp.eq.s32.totalorder 0, 0
    // Predicated region
    $region34: #{tpu_custom_call.1} parent=1 // pred_check
      %p76 = pneg %p75
    $region35: #{tpu_custom_call.1} parent=1 // pred_check_branch
      %78 = sbr.rel (%p76) target = $region37
    $region36: #{tpu_custom_call.1} parent=1 // pred_region
      %v79 = vld [vmem:[#allocation3] sm:$0xff]
      %v80 = vld [vmem:[#allocation3 + $0x8] sm:$0xff]
      %v81 = vpack.c.bf16 %v80, %v79
      %v82 = vld [vmem:[#allocation6] sm:$0xf]
      %v83 = vld [vmem:[#allocation6 + $0x4] sm:$0xf]
      %v84 = vld [vmem:[#allocation6 + $0x8] sm:$0xf]
      %v85 = vld [vmem:[#allocation6 + $0xc] sm:$0xf]
      %v86 = vld [vmem:[#allocation8] sm:$0x1]
      %v87 = vlaneseq
      %v88 = vshrl.u32 %v87, 7
      %v89 = vsub.s32 0, %v88
      %v90 = vrot.slane %v86, %v89
      %v95 = vunpack.c.l.b16 %v82
      %v96 = vunpack.c.l.b16 %v83
      %v97 = vunpack.c.l.b16 %v84
      %v98 = vunpack.c.l.b16 %v85
      %v99 = vpack.c.b16 %v96, %v95
      %v100 = vpack.c.b16 %v98, %v97
      %vm103 = vcmask 261120
      %v105 = vsel %vm103, %v81, 0
      %107 = vmatprep.subr.bf16.mxu0 0
      %108 = vmatpush1.bf16.msra.mxu0 %v99
      %109 = vmatprep.subr.bf16.mxu0 0
      %110 = vmatpush1.bf16.msra.mxu0 %v100
      %111 = vmatprep.subr.bf16.mxu0 0
      %112 = vmatpush1.bf16.msra.mxu0 0
      %113 = vmatprep.subr.bf16.mxu0 0
      %114 = vmatpush1.bf16.msra.mxu0 0
      %115 = vmatprep.subr.bf16.mxu0 0
      %116 = vmatpush1.bf16.msra.mxu0 0
      %117 = vmatprep.subr.bf16.mxu0 0
      %118 = vmatpush1.bf16.msra.mxu0 0
      %119 = vmatprep.subr.bf16.mxu0 0
      %120 = vmatpush1.bf16.msra.mxu0 0
      %121 = vmatprep.subr.bf16.mxu0 0
      %122 = vmatpush1.bf16.msra.mxu0 0
      %123 = vmatprep.subr.bf16.mxu0 0
      %124 = vmatpush1.bf16.msra.mxu0 0
      %125 = vmatprep.subr.bf16.mxu0 0
      %126 = vmatpush1.bf16.msra.mxu0 0
      %127 = vmatprep.subr.bf16.mxu0 0
      %128 = vmatpush1.bf16.msra.mxu0 0
      %129 = vmatprep.subr.bf16.mxu0 0
      %130 = vmatpush1.bf16.msra.mxu0 0
      %131 = vmatprep.subr.bf16.mxu0 0
      %132 = vmatpush1.bf16.msra.mxu0 0
      %133 = vmatprep.subr.bf16.mxu0 0
      %134 = vmatpush1.bf16.msra.mxu0 0
      %135 = vmatprep.subr.bf16.mxu0 0
      %136 = vmatpush1.bf16.msra.mxu0 0
      %137 = vmatprep.subr.bf16.mxu0 0
      %138 = vmatpush1.bf16.msra.mxu0 0
      %139 = vmatprep.mubr.bf16.mxu0 0
      %140 = vmatmul.mubr.bf16.gmra.mrb[0].mxu0 %v105
      %v141 = vpop.f32.mrb[0].mxu0
      %v142 = vadd.f32 %v90, %v141
      %v143 = vpop.f32.mrb[0].mxu0
      %v144 = vpop.f32.mrb[0].mxu0
      %v145 = vadd.f32 %v90, %v144
      %v146 = vpop.f32.mrb[0].mxu0
      %147 = vdwg.mxu0
      %v148 = vmul.f32 %v142, 0.5
      %v149 = vmul.f32 %v145, 0.5
      %v150 = vmul.f32 %v142, 0.70710677
      %v151 = vmul.f32 %v145, 0.70710677
      %vm152 = vcmp.ge.f32.partialorder %v150, 0.0
      %vm153 = vcmp.ge.f32.partialorder %v151, 0.0
      %v154 = vsel %vm152, 1.0, -1.0
      %v155 = vsel %vm153, 1.0, -1.0
      %v156 = vand.u32 2147483647, %v150
      %v157 = vand.u32 2147483647, %v151
      %v158 = vmul.f32 %v156, 0.3275911
      %v159 = vmul.f32 %v157, 0.3275911
      %v160 = vadd.f32 %v158, 1.0
      %v161 = vadd.f32 %v159, 1.0
      %v162 = vrcp.pop %v160
      %v163 = vrcp.pop %v161
      %v164 = vmul.f32 %v160, %v162
      %v165 = vmul.f32 %v161, %v163
      %v166 = vsub.f32 2.0, %v164
      %v167 = vsub.f32 2.0, %v165
      %v168 = vmul.f32 %v162, %v166
      %v169 = vmul.f32 %v163, %v167
      %v170 = vmul.f32 %v168, 1.0614054
      %v171 = vmul.f32 %v169, 1.0614054
      %v172 = vadd.f32 %v170, -1.4531521
      %v173 = vadd.f32 %v171, -1.4531521
      %v174 = vmul.f32 %v172, %v168
      %v175 = vmul.f32 %v173, %v169
      %v176 = vadd.f32 %v174, 1.4214138
      %v177 = vadd.f32 %v175, 1.4214138
      %v178 = vmul.f32 %v176, %v168
      %v179 = vmul.f32 %v177, %v169
      %v180 = vadd.f32 %v178, -0.28449672
      %v181 = vadd.f32 %v179, -0.28449672
      %v182 = vmul.f32 %v180, %v168
      %v183 = vmul.f32 %v181, %v169
      %v184 = vadd.f32 %v182, 0.2548296
      %v185 = vadd.f32 %v183, 0.2548296
      %v186 = vmul.f32 %v184, %v168
      %v187 = vmul.f32 %v185, %v169
      %v188 = vsub.f32 0.0, %v156
      %v189 = vsub.f32 0.0, %v157
      %v190 = vmul.f32 %v188, %v156
      %v191 = vmul.f32 %v189, %v157
      %v192 = vmul.f32 %v190, 1.442695
      %v193 = vpow.pop %v192
      %v194 = vmul.f32 %v191, 1.442695
      %v195 = vpow.pop %v194
      %v196 = vmul.f32 %v186, %v193
      %v197 = vmul.f32 %v187, %v195
      %v198 = vsub.f32 1.0, %v196
      %v199 = vsub.f32 1.0, %v197
      %v200 = vmul.f32 %v154, %v198
      %v201 = vmul.f32 %v155, %v199
      %v202 = vadd.f32 %v200, 1.0
      %v203 = vadd.f32 %v201, 1.0
      %v204 = vmul.f32 %v148, %v202
      %v205 = vmul.f32 %v149, %v203
      %v206 = vsel %vm103, %v204, 0.0
      %207 = vadd.xlane.f32.xlu0 %v206
      %v208 = vpop.xlane.xlu0 %207
      %v209 = vsel %vm103, %v205, 0.0
      %210 = vadd.xlane.f32.xlu0 %v209
      %v211 = vpop.xlane.xlu0 %210
      %v212 = vrcp.pop 32.0
      %v213 = vmul.f32 %v208, %v212
      %v214 = vmul.f32 %v211, %v212
      %v215 = vsub.f32 %v204, %v213
      %v216 = vsub.f32 %v205, %v214
      %v217 = vmul.f32 %v215, %v215
      %v218 = vmul.f32 %v216, %v216
      %v219 = vsel %vm103, %v217, 0.0
      %220 = vadd.xlane.f32.xlu0 %v219
      %v221 = vpop.xlane.xlu0 %220
      %v222 = vsel %vm103, %v218, 0.0
      %223 = vadd.xlane.f32.xlu0 %v222
      %v224 = vpop.xlane.xlu0 %223
      %v225 = vmul.f32 %v221, %v212
      %v226 = vmul.f32 %v224, %v212
      %v227 = vadd.f32 %v225, 1e-12
      %v228 = vadd.f32 %v226, 1e-12
      %v229 = vrsqrt.pop %v227
      %v230 = vrsqrt.pop %v228
      %v231 = vmul.f32 %v215, %v229
      %v232 = vmul.f32 %v216, %v230
      %v233 = vld [vmem:[#allocation8 + $0x1] sm:$0x1]
      %v234 = vlaneseq
      %v235 = vshrl.u32 %v234, 7
      %v236 = vsub.s32 0, %v235
      %v237 = vrot.slane %v233, %v236
      %v238 = vmul.f32 %v231, %v237
      %v239 = vmul.f32 %v232, %v237
      %v240 = vld [vmem:[#allocation8 + $0x2] sm:$0x1]
      %v241 = vlaneseq
      %v242 = vshrl.u32 %v241, 7
      %v243 = vsub.s32 0, %v242
      %v244 = vrot.slane %v240, %v243
      %v245 = vadd.f32 %v238, %v244
      %v246 = vadd.f32 %v239, %v244
      %247 = vst.msk [vmem:[#allocation12] sm:$0xff] %vm103, %v245
      %248 = vst.msk [vmem:[#allocation12 + $0x8] sm:$0xff] %vm103, %v246
      %v249 = vpack.c.bf16 %v246, %v245
      %250 = vst.msk [vmem:[#allocation2] sm:$0xff] %vm103, %v249
    $region37: #{tpu_custom_call.1} parent=1 // pred_fallthru
      _
    %v251 = vld [vmem:[#allocation2] sm:$0xff]
    %v252 = vld [vmem:[#allocation9] sm:$0xf]
    %v253 = vld [vmem:[#allocation9 + $0x4] sm:$0xf]
    %v254 = vld [vmem:[#allocation9 + $0x8] sm:$0xf]
    %v255 = vld [vmem:[#allocation9 + $0xc] sm:$0xf]
    %v260 = vunpack.c.l.b16 %v252
    %v261 = vunpack.c.l.b16 %v253
    %v262 = vunpack.c.l.b16 %v254
    %v263 = vunpack.c.l.b16 %v255
    %v264 = vpack.c.b16 %v261, %v260
    %v265 = vpack.c.b16 %v263, %v262
    %vm268 = vcmask 261120
    %v270 = vsel %vm268, %v251, 0
    %272 = vmatprep.subr.bf16.mxu0 0
    %273 = vmatpush1.bf16.msra.mxu0 %v264
    %274 = vmatprep.subr.bf16.mxu0 0
    %275 = vmatpush1.bf16.msra.mxu0 %v265
    %276 = vmatprep.subr.bf16.mxu0 0
    %277 = vmatpush1.bf16.msra.mxu0 0
    %278 = vmatprep.subr.bf16.mxu0 0
    %279 = vmatpush1.bf16.msra.mxu0 0
    %280 = vmatprep.subr.bf16.mxu0 0
    %281 = vmatpush1.bf16.msra.mxu0 0
    %282 = vmatprep.subr.bf16.mxu0 0
    %283 = vmatpush1.bf16.msra.mxu0 0
    %284 = vmatprep.subr.bf16.mxu0 0
    %285 = vmatpush1.bf16.msra.mxu0 0
    %286 = vmatprep.subr.bf16.mxu0 0
    %287 = vmatpush1.bf16.msra.mxu0 0
    %288 = vmatprep.subr.bf16.mxu0 0
    %289 = vmatpush1.bf16.msra.mxu0 0
    %290 = vmatprep.subr.bf16.mxu0 0
    %291 = vmatpush1.bf16.msra.mxu0 0
    %292 = vmatprep.subr.bf16.mxu0 0
    %293 = vmatpush1.bf16.msra.mxu0 0
    %294 = vmatprep.subr.bf16.mxu0 0
    %295 = vmatpush1.bf16.msra.mxu0 0
    %296 = vmatprep.subr.bf16.mxu0 0
    %297 = vmatpush1.bf16.msra.mxu0 0
    %298 = vmatprep.subr.bf16.mxu0 0
    %299 = vmatpush1.bf16.msra.mxu0 0
    %300 = vmatprep.subr.bf16.mxu0 0
    %301 = vmatpush1.bf16.msra.mxu0 0
    %302 = vmatprep.subr.bf16.mxu0 0
    %303 = vmatpush1.bf16.msra.mxu0 0
    %304 = vmatprep.mubr.bf16.mxu0 0
    %305 = vmatmul.mubr.bf16.gmra.mrb[0].mxu0 %v270
    %v306 = vpop.f32.mrb[0].mxu0
    %v307 = vadd.f32 0.0, %v306
    %v308 = vpop.f32.mrb[0].mxu0
    %v309 = vpop.f32.mrb[0].mxu0
    %v310 = vadd.f32 0.0, %v309
    %v311 = vpop.f32.mrb[0].mxu0
    %312 = vdwg.mxu0
    %313 = vst [vmem:[#allocation11] sm:$0xff] %v307
    %314 = vst [vmem:[#allocation11 + $0x8] sm:$0xff] %v310
    // Predicated region
    $region38: #{tpu_custom_call.1} parent=1 // pred_check
      _
    $region39: #{tpu_custom_call.1} parent=1 // pred_check_branch
      %316 = sbr.rel (0) target = $region41
    $region40: #{tpu_custom_call.1} parent=1 // pred_region
      %s318 = ssub.s32 256, 256
      %319 = vsyncadd [#allocation5], %s318
      %s320 = sshll.u32 [#allocation11], 4
      %s321 = int_to_ptr.vmem [resolvable:$true] %s320
      %326 = dma.vmem_to_hbm [thread:$0]  %s321, 256, %s4, [#allocation5], 128, 128, 8
    $region41: #{tpu_custom_call.1} parent=1 // pred_fallthru
      _
    // Predicated region
    $region42: #{tpu_custom_call.1} parent=1 // pred_check
      _
    $region43: #{tpu_custom_call.1} parent=1 // pred_check_branch
      %328 = sbr.rel (0) target = $region45
    $region44: #{tpu_custom_call.1} parent=1 // pred_region
      %s330 = ssub.s32 256, 256
      %331 = vsyncadd [#allocation13], %s330
      %s332 = sshll.u32 [#allocation12], 4
      %s333 = int_to_ptr.vmem [resolvable:$true] %s332
      %338 = dma.vmem_to_hbm [thread:$0]  %s333, 256, %s5, [#allocation13], 128, 128, 8
    $region45: #{tpu_custom_call.1} parent=1 // pred_fallthru
      _
    // Predicated region
    $region46: #{tpu_custom_call.1} parent=1 // pred_check
      _
    $region47: #{tpu_custom_call.1} parent=1 // pred_check_branch
      %340 = sbr.rel (0) target = $region49
    $region48: #{tpu_custom_call.1} parent=1 // pred_region
      %341 = dma.done [#allocation5], 256
    $region49: #{tpu_custom_call.1} parent=1 // pred_fallthru
      _
    // Predicated region
    $region50: #{tpu_custom_call.1} parent=1 // pred_check
      _
    $region51: #{tpu_custom_call.1} parent=1 // pred_check_branch
      %343 = sbr.rel (0) target = $region53
    $region52: #{tpu_custom_call.1} parent=1 // pred_region
      %344 = dma.done [#allocation13], 256
    $region53: #{tpu_custom_call.1} parent=1 // pred_fallthru
      _
    %345 = vsyncpa [#allocation4], 1
    %346 = vsyncpa [#allocation7], 1
    %347 = vsyncpa [#allocation10], 1
    %348 = vsyncpa [#allocation5], 1
    %349 = vsyncpa [#allocation13], 1

</llo_original>
